<compile_context>
chip_gen: v7x
topology: tpu7x:2x2x1
jax: 0.10.0
libtpu: 0.0.40
codegen_flags: <defaults>
</compile_context>

<pallas_src>
import functools

import jax
import jax.numpy as jnp
import numpy as np
from jax.experimental import pallas as pl
from jax.experimental.pallas import tpu as pltpu

_COLS_CANDIDATES = (4096, 2048, 1024, 512, 256, 128)


def _vmem_capacity_bytes():
    """Per-core VMEM capacity; conservative fallback if unqueryable."""
    try:
        return int(pltpu.get_tpu_info().vmem_capacity_bytes)
    except Exception:
        return 64 * 1024 * 1024  # v7x per-TC VMEM (most restrictive)


def _is_bf16_vpu_device():
    """True on generations with bf16 VPU/EUP (v6e, v7x)."""
    try:
        kind = jax.devices()[0].device_kind.lower()
    except Exception:
        return False
    return ("v6" in kind) or ("v7" in kind)


def _sublane_granule(dtype):
    """Sublane multiple for fully-packed tiles: 8 f32, 16 bf16, 32 int8/fp8."""
    itemsize = np.dtype(dtype).itemsize
    return 8 * max(1, 4 // itemsize)


def _plan(n, dtype):
    """Pick (cols, rows, block_rows, grid, tail_elems, vmem_limit) for the slab."""
    granule = _sublane_granule(dtype)
    itemsize = np.dtype(dtype).itemsize

    # Lane width: biggest multiple of 128 that still gives >= 2 sublane tiles
    # of rows; prefer an exact fit (no ragged tail).
    cols = None
    for want_exact in (True, False):
        for need_rows in (2 * granule, 1):
            for c in _COLS_CANDIDATES:
                if n // c >= need_rows and (n % c == 0 or not want_exact):
                    cols = c
                    break
            if cols is not None:
                break
        if cols is not None:
            break
    if cols is None:  # n < 128: no lane-dense slab possible
        return None

    rows = n // cols
    tail = n - rows * cols

    # VMEM budget: in + out are double-buffered in the input dtype; the body
    # also holds ~2 block-sized f32 temporaries (upcast x and the f32 noise).
    vmem_limit = min(_vmem_capacity_bytes() // 2, 48 * 1024 * 1024)
    budget = vmem_limit // 2                       # headroom for Mosaic scratch
    bytes_per_elem = 4 * itemsize + 8              # 2*in + 2*out + 2 f32 temps
    max_block_elems = max(granule * cols, budget // bytes_per_elem)
    max_rows = max(granule, (max_block_elems // cols) // granule * granule)

    if rows <= granule:
        block_rows = rows          # full-extent block (allowed even if < 8)
    else:
        block_rows = min(max_rows, (rows // granule) * granule)
        if rows >= 2 * granule:
            # Keep grid >= 2 so the "parallel" axis can shard across both v7x
            # TensorCores even for medium-sized inputs.
            split = ((rows + 1) // 2 + granule - 1) // granule * granule
            block_rows = min(block_rows, split)
        block_rows = max(granule, block_rows)

    grid = pl.cdiv(rows, block_rows)
    return cols, rows, block_rows, grid, tail, vmem_limit


def _gn_prng_kernel(seed_ref, x_ref, o_ref, *, sigma, compute_dtype):
    """TPU path: generate N(0,1) in-kernel with the hardware PRNG."""
    # Mix the user seed with the grid position (multiply by large odd primes,
    # xor a second stride) so adjacent tiles / adjacent user seeds get
    # decorrelated streams, deterministically even under megacore sharding.
    pid = pl.program_id(0)
    s = seed_ref[0] * jnp.int32(1000003) + pid * jnp.int32(7919) + jnp.int32(0x5BD1)
    s = s ^ (pid * jnp.int32(40503))
    pltpu.prng_seed(s)

    x = x_ref[...].astype(compute_dtype)
    # TODO(synk): on v6e/v7x generate bf16 noise (or prng_random_bits + a
    # VPU-only normal approximation) if EUP transcendentals ever become the
    # binding slot; f32 stateful_normal is kept here for lowering safety.
    noise = pltpu.stateful_normal(x.shape, jnp.float32).astype(compute_dtype)
    scale = jnp.asarray(sigma, dtype=compute_dtype)
    o_ref[...] = (x + (scale * x) * noise).astype(o_ref.dtype)


def _gn_extnoise_kernel(x_ref, n_ref, o_ref, *, sigma, compute_dtype):
    """Fallback path (non-TPU backends): noise is a precomputed input."""
    x = x_ref[...].astype(compute_dtype)
    noise = n_ref[...].astype(compute_dtype)
    scale = jnp.asarray(sigma, dtype=compute_dtype)
    o_ref[...] = (x + (scale * x) * noise).astype(o_ref.dtype)


def gaussian_noise_forward(x, *, sigma=0.1, training=True, seed=0,
                           is_relative_detach=True):
    """Forward pass of GaussianNoiseXXXX.  x: float array of any shape (NCHW)."""
    del is_relative_detach
    # TODO(synk): is_relative_detach only changes gradients (detach of the
    # sigma*x scale); a custom_vjp would be needed for autodiff through this
    # kernel.  Forward values are unaffected.
    # NOTE: `training` and `sigma` are treated as static Python values (as in
    # the PyTorch module); do not pass traced values for them under jit.
    if (not training) or sigma == 0:
        return x
    if x.size == 0:
        return x

    orig_shape = x.shape
    orig_dtype = x.dtype
    n = int(x.size)
    plan = _plan(n, orig_dtype)

    compute_dtype = (orig_dtype
                     if (orig_dtype == jnp.bfloat16 and _is_bf16_vpu_device())
                     else jnp.float32)

    flat = x.reshape(-1)

    if plan is None:
        # Tiny input (< one 128-lane tile): plain-XLA fallback.
        noise = jax.random.normal(jax.random.PRNGKey(seed), flat.shape,
                                  dtype=jnp.float32)
        xf = flat.astype(jnp.float32)
        return (xf + (float(sigma) * xf) * noise).astype(orig_dtype).reshape(orig_shape)

    cols, rows, block_rows, grid, tail, vmem_limit = plan
    bulk = rows * cols
    slab = (flat if tail == 0 else flat[:bulk]).reshape(rows, cols)

    if jax.default_backend() == "tpu":
        itemsize = np.dtype(orig_dtype).itemsize
        cost = pl.CostEstimate(flops=3 * bulk,
                               transcendentals=3 * bulk,
                               bytes_accessed=2 * bulk * itemsize)
        seed_arr = jnp.asarray([seed], dtype=jnp.int32)
        out_slab = pl.pallas_call(
            functools.partial(_gn_prng_kernel, sigma=float(sigma),
                              compute_dtype=compute_dtype),
            out_shape=jax.ShapeDtypeStruct((rows, cols), orig_dtype),
            grid_spec=pltpu.PrefetchScalarGridSpec(
                num_scalar_prefetch=1,
                grid=(grid,),
                in_specs=[pl.BlockSpec((block_rows, cols),
                                       lambda i, seed_ref: (i, 0))],
                out_specs=pl.BlockSpec((block_rows, cols),
                                       lambda i, seed_ref: (i, 0)),
            ),
            compiler_params=pltpu.CompilerParams(
                dimension_semantics=("parallel",),
                vmem_limit_bytes=int(vmem_limit)),
            cost_estimate=cost,
        )(seed_arr, slab)
    else:
        # Non-TPU backend: hardware-PRNG primitives have no lowering, so feed
        # precomputed Gaussian noise to an equivalent elementwise kernel.
        noise = jax.random.normal(jax.random.PRNGKey(seed), (rows, cols),
                                  dtype=jnp.float32)
        out_slab = pl.pallas_call(
            functools.partial(_gn_extnoise_kernel, sigma=float(sigma),
                              compute_dtype=compute_dtype),
            out_shape=jax.ShapeDtypeStruct((rows, cols), orig_dtype),
            grid=(grid,),
            in_specs=[pl.BlockSpec((block_rows, cols), lambda i: (i, 0)),
                      pl.BlockSpec((block_rows, cols), lambda i: (i, 0))],
            out_specs=pl.BlockSpec((block_rows, cols), lambda i: (i, 0)),
        )(slab, noise)

    out_flat = out_slab.reshape(-1)
    if tail:
        # Ragged remainder (< cols elements): handled with plain jnp instead of
        # a pad + slice round trip over the whole array.
        tail_x = flat[bulk:].astype(jnp.float32)
        tail_noise = jax.random.normal(jax.random.PRNGKey(seed ^ 0x5F3759DF),
                                       tail_x.shape, dtype=jnp.float32)
        tail_out = (tail_x + (float(sigma) * tail_x) * tail_noise).astype(orig_dtype)
        out_flat = jnp.concatenate([out_flat, tail_out])
    return out_flat.reshape(orig_shape)


if __name__ == "__main__":
    key = jax.random.PRNGKey(0)
    x = jax.random.normal(key, (2, 4, 16, 16), dtype=jnp.float32)  # NCHW

    # Training mode: noise is added.
    y = jax.block_until_ready(
        gaussian_noise_forward(x, sigma=0.1, training=True, seed=42))
    assert y.shape == x.shape and y.dtype == x.dtype
    diff = y - x
    assert float(jnp.max(jnp.abs(diff))) > 0.0
    # |diff| = sigma*|x|*|N(0,1)|  ->  relative noise should be bounded.
    rel = jnp.abs(diff) / (0.1 * jnp.abs(x) + 1e-12)
    assert float(jnp.max(rel)) < 8.0

    # Eval mode (or sigma == 0): identity.
    y_eval = jax.block_until_ready(
        gaussian_noise_forward(x, sigma=0.1, training=False))
    assert bool(jnp.all(y_eval == x))

    # Larger input exercising the multi-step tiled grid (grid >= 2).
    x2 = jax.random.normal(jax.random.PRNGKey(1), (2, 16, 256, 128),
                           dtype=jnp.float32)
    y2 = jax.block_until_ready(
        gaussian_noise_forward(x2, sigma=0.2, training=True, seed=7))
    assert y2.shape == x2.shape and y2.dtype == x2.dtype
    z = (y2 - x2) / (0.2 * jnp.abs(x2) + 1e-12)   # ~ sign(x)*N(0,1)
    assert abs(float(jnp.mean(z))) < 0.05
    assert 0.8 < float(jnp.std(z)) < 1.2

    print("KERNEL_OK")
</pallas_src>

<mosaic_0001>
module attributes {stable_mosaic.version = 11 : i64} {
  func.func @_gn_extnoise_kernel(%arg0: i32, %arg1: memref<8x128xf32, #tpu.memory_space<vmem>>, %arg2: memref<8x128xf32, #tpu.memory_space<vmem>>, %arg3: memref<8x128xf32, #tpu.memory_space<vmem>>) attributes {dimension_semantics = [#tpu.dimension_semantics<arbitrary>], iteration_bounds = array<i64: 2>, scalar_prefetch = 0 : i64, scratch_operands = 0 : i64, tpu.core_type = #tpu.core_type<tc>, window_params = [{transform_indices = @transform_0, window_bounds = array<i64: 8, 128>}, {transform_indices = @transform_1, window_bounds = array<i64: 8, 128>}, {transform_indices = @transform_2, window_bounds = array<i64: 8, 128>}]} {
    %c0 = arith.constant 0 : index
    %c0_0 = arith.constant 0 : index
    %0 = vector.load %arg1[%c0, %c0_0] : memref<8x128xf32, #tpu.memory_space<vmem>>, vector<8x128xf32>
    %c0_1 = arith.constant 0 : index
    %c0_2 = arith.constant 0 : index
    %1 = vector.load %arg2[%c0_1, %c0_2] : memref<8x128xf32, #tpu.memory_space<vmem>>, vector<8x128xf32>
    %cst = arith.constant 1.000000e-01 : f32
    %2 = vector.broadcast %cst : f32 to vector<8x128xf32>
    %3 = arith.mulf %2, %0 : vector<8x128xf32>
    %4 = arith.mulf %3, %1 : vector<8x128xf32>
    %5 = arith.addf %0, %4 : vector<8x128xf32>
    %c0_3 = arith.constant 0 : index
    %c0_4 = arith.constant 0 : index
    %6 = vector.load %arg3[%c0_3, %c0_4] : memref<8x128xf32, #tpu.memory_space<vmem>>, vector<8x128xf32>
    tpu.vector_store %arg3[%c0_3, %c0_4], %5 {strides = array<i32>} : memref<8x128xf32, #tpu.memory_space<vmem>>, vector<8x128xf32>,
    return
  }
  func.func @transform_0(%arg0: i32) -> (i32, i32) {
    %c0_i32 = arith.constant 0 : i32
    %c0_i32_0 = arith.constant 0 : i32
    return %arg0, %c0_i32 : i32, i32
  }
  func.func @transform_1(%arg0: i32) -> (i32, i32) {
    %c0_i32 = arith.constant 0 : i32
    %c0_i32_0 = arith.constant 0 : i32
    return %arg0, %c0_i32 : i32, i32
  }
  func.func @transform_2(%arg0: i32) -> (i32, i32) {
    %c0_i32 = arith.constant 0 : i32
    %c0_i32_0 = arith.constant 0 : i32
    return %arg0, %c0_i32 : i32, i32
  }
}

</mosaic_0001>

<llo_original>
// kernel: tpu_custom_call.1
$region0: #{tpu_custom_call.1}
  #allocation0 [shape = 'u32[]', space=smem, size = 0x4, offset = 0x4, fixed_abs, tag = 'smem constant byte address 0x4 - core index']
  #allocation1 [shape = 'u32[144,128]{1,0:T(1,128)}', space=vmem, size = 0x12000, scoped, tag = 'internal scratch']
  %s0 = inlined_call_operand.hbm [shape: f32[16,128], index: 0, kind: input, shape index: {}]
  %s1 = inlined_call_operand.hbm [shape: f32[16,128], index: 1, kind: input, shape index: {}]
  %s2 = inlined_call_operand.hbm [shape: f32[16,128], index: 2, kind: output, shape index: {}]
  %s3 = sld [smem:[#allocation0]]
  $region49: #{tpu_custom_call.1} parent=0
    _
  %s5 = ssub.s32 1, %s3
  %s6 = scalar_select 0, %s5, %s3
  $region1: #{tpu_custom_call.1} parent=0
    #allocation2 [shape = 'u8[8192]{0}', space=vmem, size = 0x2000, scoped, tag = 'input window, operand 0']
    #allocation3 [shape = 's32[2]{0}', space=sflag, size = 0x8, scoped, tag = 'scoped memory for tpu_custom_call.1']
    #allocation4 [shape = 's32[2]{0}', space=sflag, size = 0x8, scoped, tag = 'scoped memory for tpu_custom_call.1']
    #allocation5 [shape = 'u8[8192]{0}', space=vmem, size = 0x2000, scoped, tag = 'input window, operand 1']
    #allocation6 [shape = 's32[2]{0}', space=sflag, size = 0x8, scoped, tag = 'scoped memory for tpu_custom_call.1']
    #allocation7 [shape = 'u8[8192]{0}', space=vmem, size = 0x2000, scoped, tag = 'output window, operand 0']
    %7 = vsyncpa [#allocation3], 0
    %s8 = scalar_lea.sflag [#allocation3], 1
    %9 = vsyncpa %s8, 0
    %10 = vsyncpa [#allocation6], 0
    %s11 = scalar_lea.sflag [#allocation6], 1
    %12 = vsyncpa %s11, 0
    %13 = vsyncpa [#allocation4], 0
    %s14 = scalar_lea.sflag [#allocation4], 1
    %15 = vsyncpa %s14, 0
    loop: start=0, step=1, limit=4
    $region2: #{tpu_custom_call.1} parent=1 // loop_pre_header
      _
    $region3: #{tpu_custom_call.1} parent=1 // loop_header
      %s17 = sphi 0, %s21
      %p18 = scmp.ge.s32.totalorder %s17, 4
      %s27 = sphi 0, %s29
      %s30 = sphi 0, %s27
      %s31 = sphi 0, %s30
      %s47 = sphi 0, %s31
      %s53 = sphi 0, %s55
      %s56 = sphi 0, %s53
      %s57 = sphi 0, %s56
      %s73 = sphi 0, %s57
      %s79 = sphi 0, %s81
      %s82 = sphi 0, %s79
      %s83 = sphi 0, %s82
      %s99 = sphi 0, %s83
    $region4: #{tpu_custom_call.1} parent=1 // loop_header_branch
      %20 = sbr.rel (%p18) target = $region8
    $region5: #{tpu_custom_call.1} parent=1 // loop_body
      %s22 = ssub.s32 %s17, 1
      %s23 = ssub.s32 %s17, 2
      %s24 = sadd.s32 %s17, 1
      %s25 = ssub.s32 %s17, %s24
      %p26 = scmp.eq.s32.totalorder %s25, 0
      %s28 = sadd.s32 %s27, 1
      %s29 = scalar_select %p26, %s27, %s28
      %p32 = pneg %p26
      %p33 = scmp.eq.s32.totalorder %s17, 1
      %p34 = por %p32, %p33
      %p35 = scmp.ne.s32.totalorder %s27, %s30
      %p36 = scmp.eq.s32.totalorder %s17, 0
      %p37 = por %p35, %p36
      %p38 = scmp.ne.s32.totalorder %s27, %s30
      %p39 = scmp.eq.s32.totalorder %s22, 1
      %p40 = por %p38, %p39
      %p41 = scmp.ne.s32.totalorder %s30, %s31
      %p42 = scmp.eq.s32.totalorder %s22, 0
      %p43 = por %p41, %p42
      %p44 = scmp.ne.s32.totalorder %s30, %s31
      %p45 = scmp.eq.s32.totalorder %s23, 1
      %p46 = por %p44, %p45
      %p48 = scmp.ne.s32.totalorder %s31, %s47
      %p49 = scmp.eq.s32.totalorder %s23, 0
      %p50 = por %p48, %p49
      %s51 = ssub.s32 %s17, %s24
      %p52 = scmp.eq.s32.totalorder %s51, 0
      %s54 = sadd.s32 %s53, 1
      %s55 = scalar_select %p52, %s53, %s54
      %p58 = pneg %p52
      %p59 = scmp.eq.s32.totalorder %s17, 1
      %p60 = por %p58, %p59
      %p61 = scmp.ne.s32.totalorder %s53, %s56
      %p62 = scmp.eq.s32.totalorder %s17, 0
      %p63 = por %p61, %p62
      %p64 = scmp.ne.s32.totalorder %s53, %s56
      %p65 = scmp.eq.s32.totalorder %s22, 1
      %p66 = por %p64, %p65
      %p67 = scmp.ne.s32.totalorder %s56, %s57
      %p68 = scmp.eq.s32.totalorder %s22, 0
      %p69 = por %p67, %p68
      %p70 = scmp.ne.s32.totalorder %s56, %s57
      %p71 = scmp.eq.s32.totalorder %s23, 1
      %p72 = por %p70, %p71
      %p74 = scmp.ne.s32.totalorder %s57, %s73
      %p75 = scmp.eq.s32.totalorder %s23, 0
      %p76 = por %p74, %p75
      %s77 = ssub.s32 %s17, %s24
      %p78 = scmp.eq.s32.totalorder %s77, 0
      %s80 = sadd.s32 %s79, 1
      %s81 = scalar_select %p78, %s79, %s80
      %p84 = pneg %p78
      %p85 = scmp.eq.s32.totalorder %s17, 1
      %p86 = por %p84, %p85
      %p87 = scmp.ne.s32.totalorder %s79, %s82
      %p88 = scmp.eq.s32.totalorder %s17, 0
      %p89 = por %p87, %p88
      %p90 = scmp.ne.s32.totalorder %s79, %s82
      %p91 = scmp.eq.s32.totalorder %s22, 1
      %p92 = por %p90, %p91
      %p93 = scmp.ne.s32.totalorder %s82, %s83
      %p94 = scmp.eq.s32.totalorder %s22, 0
      %p95 = por %p93, %p94
      %p96 = scmp.ne.s32.totalorder %s82, %s83
      %p97 = scmp.eq.s32.totalorder %s23, 1
      %p98 = por %p96, %p97
      %p100 = scmp.ne.s32.totalorder %s83, %s99
      %p101 = scmp.eq.s32.totalorder %s23, 0
      %p102 = por %p100, %p101
      %p103 = scmp.le.s32.totalorder 1, %s17
      %p104 = scmp.lt.s32.totalorder %s17, 3
      %p105 = pnand %p103, %p104
      %p106 = pneg %p105
      // Predicated region
      $region9: #{tpu_custom_call.1} parent=5 // pred_check
        _
      $region10: #{tpu_custom_call.1} parent=5 // pred_check_branch
        %108 = sbr.rel (%p105) target = $region12
      $region11: #{tpu_custom_call.1} parent=5 // pred_region
        %s109 = ssub.s32 %s17, 1
      $region12: #{tpu_custom_call.1} parent=5 // pred_fallthru
        _
      %p110 = scmp.lt.s32.totalorder %s17, 2
      // Predicated region
      $region13: #{tpu_custom_call.1} parent=5 // pred_check
        %p111 = pneg %p110
      $region14: #{tpu_custom_call.1} parent=5 // pred_check_branch
        %113 = sbr.rel (%p111) target = $region16
      $region15: #{tpu_custom_call.1} parent=5 // pred_region
        // Predicated region
        $region17: #{tpu_custom_call.1} parent=15 // pred_check
          %p114 = pneg %p37
        $region18: #{tpu_custom_call.1} parent=15 // pred_check_branch
          %116 = sbr.rel (%p114) target = $region20
        $region19: #{tpu_custom_call.1} parent=15 // pred_region
          %s117 = sand.u32 %s27, 1
          %s118 = scalar_lea.sflag [#allocation3], %s117
          %s119 = sand.u32 %s27, 1
          %s120 = smul.addr %s119, 8
          %s121 = scalar_lea.vmem [#allocation2], %s120
          %s123 = ssub.s32 128, 128
          %124 = vsyncadd %s118, %s123
          %s125 = smul.addr %s17, 128
          %s126 = scalar_lea.hbm %s0, %s125
          %s128 = sshll.u32 %s121, 4
          %s129 = int_to_ptr.vmem [resolvable:$true] %s128
          %131 = dma.hbm_to_vmem [thread:$0]  %s126, 128, %s129, %s118
        $region20: #{tpu_custom_call.1} parent=15 // pred_fallthru
          _
        // Predicated region
        $region21: #{tpu_custom_call.1} parent=15 // pred_check
          %p132 = pneg %p63
        $region22: #{tpu_custom_call.1} parent=15 // pred_check_branch
          %134 = sbr.rel (%p132) target = $region24
        $region23: #{tpu_custom_call.1} parent=15 // pred_region
          %s135 = sand.u32 %s53, 1
          %s136 = scalar_lea.sflag [#allocation6], %s135
          %s137 = sand.u32 %s53, 1
          %s138 = smul.addr %s137, 8
          %s139 = scalar_lea.vmem [#allocation5], %s138
          %s141 = ssub.s32 128, 128
          %142 = vsyncadd %s136, %s141
          %s143 = smul.addr %s17, 128
          %s144 = scalar_lea.hbm %s1, %s143
          %s146 = sshll.u32 %s139, 4
          %s147 = int_to_ptr.vmem [resolvable:$true] %s146
          %149 = dma.hbm_to_vmem [thread:$0]  %s144, 128, %s147, %s136
        $region24: #{tpu_custom_call.1} parent=15 // pred_fallthru
          _
      $region16: #{tpu_custom_call.1} parent=5 // pred_fallthru
        _
      %p150 = scmp.le.s32.totalorder 1, %s17
      %p151 = scmp.lt.s32.totalorder %s17, 3
      %p152 = pnand %p150, %p151
      %p153 = pneg %p152
      // Predicated region
      $region25: #{tpu_custom_call.1} parent=5 // pred_check
        _
      $region26: #{tpu_custom_call.1} parent=5 // pred_check_branch
        %155 = sbr.rel (%p152) target = $region28
      $region27: #{tpu_custom_call.1} parent=5 // pred_region
        %s156 = ssub.s32 %s17, 1
        %s157 = sand.u32 %s30, 1
        %s158 = scalar_lea.sflag [#allocation3], %s157
        %s159 = sand.u32 %s30, 1
        %s160 = smul.addr %s159, 8
        %s161 = scalar_lea.vmem [#allocation2], %s160
        // Predicated region
        $region29: #{tpu_custom_call.1} parent=27 // pred_check
          %p162 = pneg %p43
        $region30: #{tpu_custom_call.1} parent=27 // pred_check_branch
          %164 = sbr.rel (%p162) target = $region32
        $region31: #{tpu_custom_call.1} parent=27 // pred_region
          %165 = dma.done %s158, 128
        $region32: #{tpu_custom_call.1} parent=27 // pred_fallthru
          _
        %s166 = sand.u32 %s56, 1
        %s167 = scalar_lea.sflag [#allocation6], %s166
        %s168 = sand.u32 %s56, 1
        %s169 = smul.addr %s168, 8
        %s170 = scalar_lea.vmem [#allocation5], %s169
        // Predicated region
        $region33: #{tpu_custom_call.1} parent=27 // pred_check
          %p171 = pneg %p69
        $region34: #{tpu_custom_call.1} parent=27 // pred_check_branch
          %173 = sbr.rel (%p171) target = $region36
        $region35: #{tpu_custom_call.1} parent=27 // pred_region
          %174 = dma.done %s167, 128
        $region36: #{tpu_custom_call.1} parent=27 // pred_fallthru
          _
        %s175 = sand.u32 %s30, 1
        %s176 = scalar_lea.sflag [#allocation3], %s175
        %s177 = sand.u32 %s30, 1
        %s178 = smul.addr %s177, 8
        %s179 = scalar_lea.vmem [#allocation2], %s178
        %p180 = pneg %p43
        %p181 = pneg %p40
        %s182 = sand.u32 %s56, 1
        %s183 = scalar_lea.sflag [#allocation6], %s182
        %s184 = sand.u32 %s56, 1
        %s185 = smul.addr %s184, 8
        %s186 = scalar_lea.vmem [#allocation5], %s185
        %p187 = pneg %p69
        %p188 = pneg %p66
        %p189 = pneg %p95
        %p190 = pneg %p92
        %s191 = sand.u32 %s82, 1
        %s192 = scalar_lea.sflag [#allocation4], %s191
        %s193 = sand.u32 %s82, 1
        %s194 = smul.addr %s193, 8
        %s195 = scalar_lea.vmem [#allocation7], %s194
        %v196 = vld [vmem:[%s161] sm:$0xff]
        %v197 = vld [vmem:[%s170] sm:$0xff]
        %v198 = vmul.f32 %v196, 0.1
        %v199 = vmul.f32 %v198, %v197
        %v200 = vadd.f32 %v196, %v199
        %201 = vst [vmem:[%s195] sm:$0xff] %v200
        %s202 = sand.u32 %s82, 1
        %s203 = scalar_lea.sflag [#allocation4], %s202
        %s204 = sand.u32 %s82, 1
        %s205 = smul.addr %s204, 8
        %s206 = scalar_lea.vmem [#allocation7], %s205
        // Predicated region
        $region37: #{tpu_custom_call.1} parent=27 // pred_check
          %p207 = pneg %p92
        $region38: #{tpu_custom_call.1} parent=27 // pred_check_branch
          %209 = sbr.rel (%p207) target = $region40
        $region39: #{tpu_custom_call.1} parent=27 // pred_region
          %s211 = ssub.s32 128, 128
          %212 = vsyncadd %s203, %s211
          %s213 = smul.addr %s22, 128
          %s214 = scalar_lea.hbm %s2, %s213
          %s216 = sshll.u32 %s206, 4
          %s217 = int_to_ptr.vmem [resolvable:$true] %s216
          %219 = dma.vmem_to_hbm [thread:$0]  %s217, 128, %s214, %s203
        $region40: #{tpu_custom_call.1} parent=27 // pred_fallthru
          _
      $region28: #{tpu_custom_call.1} parent=5 // pred_fallthru
        _
      %p220 = scmp.le.s32.totalorder 2, %s17
      // Predicated region
      $region41: #{tpu_custom_call.1} parent=5 // pred_check
        %p221 = pneg %p220
      $region42: #{tpu_custom_call.1} parent=5 // pred_check_branch
        %223 = sbr.rel (%p221) target = $region44
      $region43: #{tpu_custom_call.1} parent=5 // pred_region
        %s224 = ssub.s32 %s17, 2
        // Predicated region
        $region45: #{tpu_custom_call.1} parent=43 // pred_check
          %p225 = pneg %p98
        $region46: #{tpu_custom_call.1} parent=43 // pred_check_branch
          %227 = sbr.rel (%p225) target = $region48
        $region47: #{tpu_custom_call.1} parent=43 // pred_region
          %s228 = sand.u32 %s83, 1
          %s229 = scalar_lea.sflag [#allocation4], %s228
          %s230 = sand.u32 %s83, 1
          %s231 = smul.addr %s230, 8
          %s232 = scalar_lea.vmem [#allocation7], %s231
          %233 = dma.done %s229, 128
        $region48: #{tpu_custom_call.1} parent=43 // pred_fallthru
          _
      $region44: #{tpu_custom_call.1} parent=5 // pred_fallthru
        _
    $region6: #{tpu_custom_call.1} parent=1 // loop_footer
      %s21 = sadd.s32 1, %s17
    $region7: #{tpu_custom_call.1} parent=1 // loop_footer_branch
      %16 = sbr.rel target = $region3
    $region8: #{tpu_custom_call.1} parent=1 // loop_exit
      _
    %234 = vsyncpa [#allocation3], 1
    %s235 = scalar_lea.sflag [#allocation3], 1
    %236 = vsyncpa %s235, 1
    %237 = vsyncpa [#allocation6], 1
    %s238 = scalar_lea.sflag [#allocation6], 1
    %239 = vsyncpa %s238, 1
    %240 = vsyncpa [#allocation4], 1
    %s241 = scalar_lea.sflag [#allocation4], 1
    %242 = vsyncpa %s241, 1

</llo_original>
